<compile_context>
chip_gen: v6e
topology: v6e:2x2x1
jax: 0.10.0
libtpu: 0.0.40
codegen_flags: <defaults>
</compile_context>

<pallas_src>
import functools
import math

import jax
import jax.numpy as jnp
import numpy as np
from jax.experimental import pallas as pl
from jax.experimental.pallas import tpu as pltpu


def _round_up(x, m):
    return ((x + m - 1) // m) * m


def _tpu_hw_info():
    """Returns (physical VMEM bytes, is_v5e) with conservative fallbacks."""
    vmem_cap = 64 << 20          # safe for every generation (v7x has 64 MiB/TC)
    is_v5e = False
    try:
        vmem_cap = int(pltpu.get_tpu_info().vmem_capacity_bytes)
    except Exception:
        pass
    try:
        kind = jax.devices()[0].device_kind.lower()
        is_v5e = ("v5e" in kind) or ("v5 lite" in kind) or ("v5lite" in kind)
    except Exception:
        pass
    return vmem_cap, is_v5e


def _equal_conv_kernel(x_ref, w_ref, b_ref, o_ref, *, k, stride, tr, hq):
    """One (batch, width-tile, OC-tile, row-tile) output block.

    x_ref: (1, stride*HQ, tw, K*Cp)  kw/stride-packed image slab (compute dtype)
    w_ref: (K, K*Cp, toc)            pre-scaled packed weight taps
    b_ref: (1, toc)                  bias row (f32)
    o_ref: (1, tr, tw, toc)          output tile (lane-dense toc)
    """
    i = pl.program_id(3)                       # output-row tile index
    q0 = pl.multiple_of(i * tr, 8)             # tr is always a multiple of 8
    tw = o_ref.shape[2]
    toc = o_ref.shape[3]
    kcp = x_ref.shape[-1]
    rows = tr * tw

    # K back-to-back MXU accumulations with contraction depth K*Cp.  The kh
    # tap shift is a *static* offset on the untiled row axis (phase*HQ + dq),
    # so there are no misaligned sublane slices and no per-tap shift copies.
    acc = jnp.zeros((rows, toc), jnp.float32)
    for kh in range(k):
        row0 = (kh % stride) * hq + (kh // stride)      # static per-tap offset
        patch = x_ref[0, pl.ds(q0 + row0, tr), :, :]    # (tr, tw, K*Cp)
        acc = acc + jnp.dot(patch.reshape(rows, kcp), w_ref[kh],
                            preferred_element_type=jnp.float32)
    acc = acc + b_ref[...].astype(jnp.float32)
    o_ref[...] = acc.reshape(o_ref.shape).astype(o_ref.dtype)


@functools.partial(
    jax.jit,
    static_argnames=("stride", "padding", "compute_dtype", "data_format"))
def equal_conv2d(x, weight, bias=None, *, stride=1, padding=0,
                 compute_dtype=jnp.bfloat16, data_format="NCHW"):
    """Forward of EqualConv2d (StyleGAN2 equalized conv).

    x:      (N, C, H, W) for data_format="NCHW" (PyTorch layout) or
            (N, H, W, C) for "NHWC" (fast path, skips layout transposes).
    weight: (OC, C, K, K) unscaled parameter; bias: (OC,) or None.

    Streams activations/weights in `compute_dtype` (default bf16) with f32
    accumulation and bf16 writeback; result is cast back to x.dtype.  Pass
    compute_dtype=jnp.float32 for (near-)exact f32 numerics.
    """
    if data_format == "NCHW":
        n, c, h, w = x.shape
    else:
        n, h, w, c = x.shape
    oc, _, k, _ = weight.shape
    scale = 1.0 / math.sqrt(c * k * k)
    if bias is None:
        bias = jnp.zeros((oc,), jnp.float32)

    oh1 = (h + 2 * padding - k) // stride + 1
    ow1 = (w + 2 * padding - k) // stride + 1
    assert oh1 >= 1 and ow1 >= 1, "kernel larger than padded input"

    vmem_cap, is_v5e = _tpu_hw_info()

    # ---- TPU-friendly tiling ------------------------------------------------
    cp = _round_up(c, 8)                  # per-tap channel count
    kcp = k * cp                          # packed contraction depth (kw folded)
    oc_pad = _round_up(oc, 128)           # lane-dense output channels
    toc = 128 if (is_v5e or oc_pad % 256 != 0) else 256   # chip-keyed OC tile

    # Bound the f32 accumulator at ~512 KiB by tiling output rows AND width.
    target_rows = (512 * 1024) // (toc * 4)         # 1024 (toc=128) / 512 (256)
    max_tw = max(8, (target_rows // 8) // 8 * 8)
    tw = min(_round_up(ow1, 8), max_tw)
    ow_pad = _round_up(ow1, tw)
    tr = max(8, min((target_rows // tw) // 8 * 8, _round_up(oh1, 8)))
    oh_pad = _round_up(oh1, tr)
    n_w, n_h, n_oc = ow_pad // tw, oh_pad // tr, oc_pad // toc

    # Padded source extents.  Height is phase-split by stride (row r*stride+kh
    # lives at phase kh%stride, index r + kh//stride); width stride/kw shifts
    # are consumed by the channel packing below.
    hq = oh_pad + (k - 1) // stride       # rows per phase
    hpp = hq * stride                     # padded source height
    wpp = (ow_pad - 1) * stride + k       # padded source width

    # ---- input: -> NHWC, zero-pad, kw/stride pack, phase-split rows ---------
    x_nhwc = jnp.transpose(x, (0, 2, 3, 1)) if data_format == "NCHW" else x
    x_nhwc = x_nhwc.astype(compute_dtype)
    xp = jnp.pad(
        x_nhwc,
        ((0, 0),
         (padding, max(0, hpp - h - padding)),
         (padding, max(0, wpp - w - padding)),
         (0, cp - c)))[:, :hpp, :wpp, :]
    # Packed channel (kw*cp + cc) at output col j holds input col j*stride+kw,
    # so the kernel needs no width slices and no width stride at all.
    xpk = jnp.concatenate(
        [xp[:, :, kw:kw + (ow_pad - 1) * stride + 1:stride, :]
         for kw in range(k)], axis=-1)                      # (N, HPp, OWp, K*Cp)
    xpk = xpk.reshape(n, hq, stride, ow_pad, kcp)
    xpk = jnp.transpose(xpk, (0, 2, 1, 3, 4)).reshape(
        n, stride * hq, ow_pad, kcp)                        # (N, stride*HQ, OWp, K*Cp)

    # ---- weights: (OC, C, K, K) -> (K, K*Cp, OC_pad), pre-scaled ------------
    wt = (jnp.transpose(weight, (2, 3, 1, 0)) * scale).astype(compute_dtype)
    wt = jnp.pad(wt, ((0, 0), (0, 0), (0, cp - c), (0, oc_pad - oc)))
    w_packed = wt.reshape(k, kcp, oc_pad)                   # [kh, kw*cp+c, oc]
    b_row = jnp.pad(bias.astype(jnp.float32).reshape(1, oc),
                    ((0, 0), (0, oc_pad - oc)))

    # ---- VMEM budget (chip-aware) -------------------------------------------
    csize = jnp.dtype(compute_dtype).itemsize
    img_block = stride * hq * tw * kcp * csize
    w_block = k * kcp * toc * csize
    out_block = tr * tw * toc * csize
    acc_bytes = tr * tw * toc * 4
    vmem_ceiling = max(24 << 20, min(vmem_cap - (8 << 20), 100 << 20))

    # Single-buffer the resident image slab when double buffering it would eat
    # more than half of the per-chip budget (the one DMA per (batch, width
    # tile) is amortized over all OC / row tiles anyway).
    single_buf_img = 2 * img_block > vmem_ceiling // 2
    img_bufs = 1 if single_buf_img else 2

    vmem_est = (img_bufs * img_block + 2 * w_block + 2 * out_block
                + acc_bytes + 2 * toc * 4 + (2 << 20))
    vmem_limit = int(min(max(int(vmem_est * 1.25), 24 << 20), vmem_ceiling))

    img_shape = (1, stride * hq, tw, kcp)
    img_index = lambda b, wt_, j, i: (b, 0, wt_, 0)
    if single_buf_img:
        img_spec = pl.BlockSpec(img_shape, img_index,
                                pipeline_mode=pl.Buffered(1))
    else:
        img_spec = pl.BlockSpec(img_shape, img_index)

    cost = pl.CostEstimate(
        flops=int(2 * n * oh1 * ow1 * c * k * k * oc),
        transcendentals=0,
        bytes_accessed=int(xpk.size * csize + w_packed.size * csize
                           + b_row.size * 4
                           + n * oh_pad * ow_pad * oc_pad * csize))

    kernel = functools.partial(_equal_conv_kernel, k=k, stride=stride, tr=tr,
                               hq=hq)

    out_full = pl.pallas_call(
        kernel,
        out_shape=jax.ShapeDtypeStruct((n, oh_pad, ow_pad, oc_pad),
                                       compute_dtype),
        grid_spec=pltpu.PrefetchScalarGridSpec(
            num_scalar_prefetch=0,
            # (batch, width-tile, OC-tile, row-tile): the image slab's block
            # index depends only on (b, wt) -> DMA'd from HBM once per
            # (batch, width tile) and reused across all OC / row tiles;
            # weights are re-fetched only when the OC tile changes.
            grid=(n, n_w, n_oc, n_h),
            in_specs=[
                img_spec,
                pl.BlockSpec((k, kcp, toc), lambda b, wt_, j, i: (0, 0, j)),
                pl.BlockSpec((1, toc), lambda b, wt_, j, i: (0, j)),
            ],
            out_specs=pl.BlockSpec((1, tr, tw, toc),
                                   lambda b, wt_, j, i: (b, i, wt_, j)),
        ),
        compiler_params=pltpu.CompilerParams(
            dimension_semantics=("parallel", "parallel", "parallel",
                                 "parallel"),
            vmem_limit_bytes=vmem_limit),
        cost_estimate=cost,
    )(xpk, w_packed, b_row)

    # Slice off OC / spatial padding, return in the caller's layout & dtype.
    out = out_full[:, :oh1, :ow1, :oc]
    if data_format == "NCHW":
        out = jnp.transpose(out, (0, 3, 1, 2))
    return out.astype(x.dtype)


if __name__ == "__main__":
    # Module config (small, consistent with EqualConv2d):
    in_channels, out_channels, kernel_size = 4, 8, 3
    N, H, W = 2, 16, 16

    key = jax.random.PRNGKey(0)
    kx, kwt = jax.random.split(key)
    x = jax.random.normal(kx, (N, in_channels, H, W), dtype=jnp.float32)
    # Parameters, deterministic init (weight ~ N(0,1), bias = bias_init_val=0)
    weight = jax.random.normal(
        kwt, (out_channels, in_channels, kernel_size, kernel_size),
        dtype=jnp.float32)
    bias = jnp.zeros((out_channels,), dtype=jnp.float32)

    scale = 1.0 / math.sqrt(in_channels * kernel_size ** 2)

    def ref_conv(stride, padding):
        return jax.lax.conv_general_dilated(
            x, weight * scale,
            window_strides=(stride, stride),
            padding=[(padding, padding), (padding, padding)],
            dimension_numbers=("NCHW", "OIHW", "NCHW"),
        ) + bias.reshape(1, -1, 1, 1)

    # stride=1, padding=1 (the module's common shape-preserving configuration).
    out1 = jax.block_until_ready(
        equal_conv2d(x, weight, bias, stride=1, padding=1))
    np.testing.assert_allclose(np.asarray(out1), np.asarray(ref_conv(1, 1)),
                               rtol=5e-2, atol=5e-2)

    # stride=2 exercises the in-kernel (packed) strided-tap path.
    out2 = jax.block_until_ready(
        equal_conv2d(x, weight, bias, stride=2, padding=1))
    np.testing.assert_allclose(np.asarray(out2), np.asarray(ref_conv(2, 1)),
                               rtol=5e-2, atol=5e-2)

    print("KERNEL_OK")
</pallas_src>

<mosaic_0001>
module attributes {stable_mosaic.version = 11 : i64} {
  func.func @_equal_conv_kernel(%arg0: i32, %arg1: i32, %arg2: i32, %arg3: i32, %arg4: memref<1x18x16x24xbf16, #tpu.memory_space<vmem>>, %arg5: memref<3x24x128xbf16, #tpu.memory_space<vmem>>, %arg6: memref<1x128xf32, #tpu.memory_space<vmem>>, %arg7: memref<1x16x16x128xbf16, #tpu.memory_space<vmem>>) attributes {dimension_semantics = [#tpu.dimension_semantics<parallel>, #tpu.dimension_semantics<parallel>, #tpu.dimension_semantics<parallel>, #tpu.dimension_semantics<parallel>], iteration_bounds = array<i64: 2, 1, 1, 1>, scalar_prefetch = 0 : i64, scratch_operands = 0 : i64, tpu.core_type = #tpu.core_type<tc>, window_params = [{transform_indices = @transform_0, window_bounds = array<i64: 1, 18, 16, 24>}, {transform_indices = @transform_1, window_bounds = array<i64: 3, 24, 128>}, {transform_indices = @transform_2, window_bounds = array<i64: 1, 128>}, {transform_indices = @transform_3, window_bounds = array<i64: 1, 16, 16, 128>}]} {
    %c16_i32 = arith.constant 16 : i32
    %0 = arith.muli %arg3, %c16_i32 : i32
    %1 = tpu.assume_multiple %0, 8 : i32
    %cst = arith.constant 0.000000e+00 : f32
    %2 = vector.broadcast %cst : f32 to vector<256x128xf32>
    %c0_i32 = arith.constant 0 : i32
    %3 = arith.addi %1, %c0_i32 : i32
    %c0 = arith.constant 0 : index
    %4 = arith.index_cast %3 : i32 to index
    %c0_0 = arith.constant 0 : index
    %c0_1 = arith.constant 0 : index
    %5 = vector.load %arg4[%c0, %4, %c0_0, %c0_1] : memref<1x18x16x24xbf16, #tpu.memory_space<vmem>>, vector<1x16x16x24xbf16>
    %6 = vector.shape_cast %5 : vector<1x16x16x24xbf16> to vector<16x16x24xbf16>
    %7 = vector.shape_cast %6 : vector<16x16x24xbf16> to vector<256x24xbf16>
    %c0_2 = arith.constant 0 : index
    %c0_3 = arith.constant 0 : index
    %c0_4 = arith.constant 0 : index
    %8 = vector.load %arg5[%c0_2, %c0_3, %c0_4] : memref<3x24x128xbf16, #tpu.memory_space<vmem>>, vector<1x24x128xbf16>
    %9 = vector.shape_cast %8 : vector<1x24x128xbf16> to vector<24x128xbf16>
    %cst_5 = arith.constant dense<0.000000e+00> : vector<256x128xf32>
    %10 = tpu.matmul %7, %9, %cst_5 {dimension_numbers = #tpu.dot_dimension_numbers<[1], [0], [0], [1], [0, 0, 1, 1], [], []>} : vector<256x24xbf16>, vector<24x128xbf16>, vector<256x128xf32> -> vector<256x128xf32>
    %11 = arith.addf %2, %10 : vector<256x128xf32>
    %c1_i32 = arith.constant 1 : i32
    %12 = arith.addi %1, %c1_i32 : i32
    %c0_6 = arith.constant 0 : index
    %13 = arith.index_cast %12 : i32 to index
    %c0_7 = arith.constant 0 : index
    %c0_8 = arith.constant 0 : index
    %14 = vector.load %arg4[%c0_6, %13, %c0_7, %c0_8] : memref<1x18x16x24xbf16, #tpu.memory_space<vmem>>, vector<1x16x16x24xbf16>
    %15 = vector.shape_cast %14 : vector<1x16x16x24xbf16> to vector<16x16x24xbf16>
    %16 = vector.shape_cast %15 : vector<16x16x24xbf16> to vector<256x24xbf16>
    %c1 = arith.constant 1 : index
    %c0_9 = arith.constant 0 : index
    %c0_10 = arith.constant 0 : index
    %17 = vector.load %arg5[%c1, %c0_9, %c0_10] : memref<3x24x128xbf16, #tpu.memory_space<vmem>>, vector<1x24x128xbf16>
    %18 = vector.shape_cast %17 : vector<1x24x128xbf16> to vector<24x128xbf16>
    %cst_11 = arith.constant dense<0.000000e+00> : vector<256x128xf32>
    %19 = tpu.matmul %16, %18, %cst_11 {dimension_numbers = #tpu.dot_dimension_numbers<[1], [0], [0], [1], [0, 0, 1, 1], [], []>} : vector<256x24xbf16>, vector<24x128xbf16>, vector<256x128xf32> -> vector<256x128xf32>
    %20 = arith.addf %11, %19 : vector<256x128xf32>
    %c2_i32 = arith.constant 2 : i32
    %21 = arith.addi %1, %c2_i32 : i32
    %c0_12 = arith.constant 0 : index
    %22 = arith.index_cast %21 : i32 to index
    %c0_13 = arith.constant 0 : index
    %c0_14 = arith.constant 0 : index
    %23 = vector.load %arg4[%c0_12, %22, %c0_13, %c0_14] : memref<1x18x16x24xbf16, #tpu.memory_space<vmem>>, vector<1x16x16x24xbf16>
    %24 = vector.shape_cast %23 : vector<1x16x16x24xbf16> to vector<16x16x24xbf16>
    %25 = vector.shape_cast %24 : vector<16x16x24xbf16> to vector<256x24xbf16>
    %c2 = arith.constant 2 : index
    %c0_15 = arith.constant 0 : index
    %c0_16 = arith.constant 0 : index
    %26 = vector.load %arg5[%c2, %c0_15, %c0_16] : memref<3x24x128xbf16, #tpu.memory_space<vmem>>, vector<1x24x128xbf16>
    %27 = vector.shape_cast %26 : vector<1x24x128xbf16> to vector<24x128xbf16>
    %cst_17 = arith.constant dense<0.000000e+00> : vector<256x128xf32>
    %28 = tpu.matmul %25, %27, %cst_17 {dimension_numbers = #tpu.dot_dimension_numbers<[1], [0], [0], [1], [0, 0, 1, 1], [], []>} : vector<256x24xbf16>, vector<24x128xbf16>, vector<256x128xf32> -> vector<256x128xf32>
    %29 = arith.addf %20, %28 : vector<256x128xf32>
    %c0_18 = arith.constant 0 : index
    %c0_19 = arith.constant 0 : index
    %30 = vector.load %arg6[%c0_18, %c0_19] : memref<1x128xf32, #tpu.memory_space<vmem>>, vector<1x128xf32>
    %31 = vector.broadcast %30 : vector<1x128xf32> to vector<256x128xf32>
    %32 = arith.addf %29, %31 : vector<256x128xf32>
    %33 = vector.shape_cast %32 : vector<256x128xf32> to vector<1x16x16x128xf32>
    %34 = arith.truncf %33 : vector<1x16x16x128xf32> to vector<1x16x16x128xbf16>
    %c0_20 = arith.constant 0 : index
    %c0_21 = arith.constant 0 : index
    %c0_22 = arith.constant 0 : index
    %c0_23 = arith.constant 0 : index
    %35 = vector.load %arg7[%c0_20, %c0_21, %c0_22, %c0_23] : memref<1x16x16x128xbf16, #tpu.memory_space<vmem>>, vector<1x16x16x128xbf16>
    tpu.vector_store %arg7[%c0_20, %c0_21, %c0_22, %c0_23], %34 {strides = array<i32>} : memref<1x16x16x128xbf16, #tpu.memory_space<vmem>>, vector<1x16x16x128xbf16>,
    return
  }
  func.func @transform_0(%arg0: i32, %arg1: i32, %arg2: i32, %arg3: i32) -> (i32, i32, i32, i32) {
    %c0_i32 = arith.constant 0 : i32
    %c0_i32_0 = arith.constant 0 : i32
    %c0_i32_1 = arith.constant 0 : i32
    return %arg0, %c0_i32, %arg1, %c0_i32_0 : i32, i32, i32, i32
  }
  func.func @transform_1(%arg0: i32, %arg1: i32, %arg2: i32, %arg3: i32) -> (i32, i32, i32) {
    %c0_i32 = arith.constant 0 : i32
    %c0_i32_0 = arith.constant 0 : i32
    %c0_i32_1 = arith.constant 0 : i32
    return %c0_i32, %c0_i32_0, %arg2 : i32, i32, i32
  }
  func.func @transform_2(%arg0: i32, %arg1: i32, %arg2: i32, %arg3: i32) -> (i32, i32) {
    %c0_i32 = arith.constant 0 : i32
    %c0_i32_0 = arith.constant 0 : i32
    return %c0_i32, %arg2 : i32, i32
  }
  func.func @transform_3(%arg0: i32, %arg1: i32, %arg2: i32, %arg3: i32) -> (i32, i32, i32, i32) {
    %c0_i32 = arith.constant 0 : i32
    return %arg0, %arg3, %arg1, %arg2 : i32, i32, i32, i32
  }
}

</mosaic_0001>

<llo_original>
// kernel: equal_conv2d.1
$region0: #{equal_conv2d.1}
  #allocation0 [shape = 'u32[]', space=smem, size = 0x4, offset = 0x4, fixed_abs, tag = 'smem constant byte address 0x4 - core index']
  #allocation1 [shape = 'u32[144,128]{1,0:T(1,128)}', space=vmem, size = 0x12000, scoped, tag = 'internal scratch']
  %s0 = inlined_call_operand.vmem [shape: bf16[2,18,16,24], index: 0, kind: input, shape index: {}]
  %s1 = inlined_call_operand.vmem [shape: bf16[3,24,128], index: 1, kind: input, shape index: {}]
  %s2 = inlined_call_operand.vmem [shape: f32[1,128], index: 2, kind: input, shape index: {}]
  %s3 = inlined_call_operand.vmem [shape: bf16[2,16,16,128], index: 3, kind: output, shape index: {}]
  %s4 = sld [smem:[#allocation0]]
  $region45: #{equal_conv2d.1} parent=0
    _
  %s6 = ssub.s32 1, %s4
  %s7 = scalar_select 0, %s6, %s4
  loop: start=0, step=1, limit=4
  $region2: #{equal_conv2d.1} parent=0 // loop_pre_header
    _
  $region3: #{equal_conv2d.1} parent=0 // loop_header
    %s9 = sphi 0, %s13
    %p10 = scmp.ge.s32.totalorder %s9, 4
    %s16 = sphi 0, %s42
    %s17 = sphi 0, %s38
    %s18 = sphi 0, %s34
    %s19 = sphi 0, %s30
    %s20 = sphi 0, %s16
    %s21 = sphi 0, %s17
    %s22 = sphi 0, %s18
    %s23 = sphi 0, %s19
    %s24 = sphi 0, %s20
    %s25 = sphi 0, %s21
    %s26 = sphi 0, %s22
    %s27 = sphi 0, %s23
    %s47 = sphi 0, %s49
    %s50 = sphi 0, %s47
    %s51 = sphi 0, %s50
    %s67 = sphi 0, %s51
    %s73 = sphi 0, %s75
    %s76 = sphi 0, %s73
    %s77 = sphi 0, %s76
    %s93 = sphi 0, %s77
    %s99 = sphi 0, %s101
    %s102 = sphi 0, %s99
    %s103 = sphi 0, %s102
    %s119 = sphi 0, %s103
    %s131 = sphi 0, %s133
    %s134 = sphi 0, %s131
    %s135 = sphi 0, %s134
    %s151 = sphi 0, %s135
  $region4: #{equal_conv2d.1} parent=0 // loop_header_branch
    %12 = sbr.rel (%p10) target = $region8
  $region5: #{equal_conv2d.1} parent=0 // loop_body
    %s14 = ssub.s32 %s9, 1
    %s15 = ssub.s32 %s9, 2
    %s28 = sadd.s32 1, %s19
    %p29 = scmp.ge.s32.totalorder %s28, 1
    %s30 = scalar_select %p29, 0, %s28
    %s31 = sadd.s32 1, %s18
    %s32 = scalar_select %p29, %s31, %s18
    %p33 = scmp.ge.s32.totalorder %s32, 1
    %s34 = scalar_select %p33, 0, %s32
    %s35 = sadd.s32 1, %s17
    %s36 = scalar_select %p33, %s35, %s17
    %p37 = scmp.ge.s32.totalorder %s36, 1
    %s38 = scalar_select %p37, 0, %s36
    %s39 = sadd.s32 1, %s16
    %s40 = scalar_select %p37, %s39, %s16
    %p41 = scmp.ge.s32.totalorder %s40, 2
    %s42 = scalar_select %p41, 0, %s40
    %s43 = ssub.s32 %s16, %s42
    %s44 = ssub.s32 %s17, %s38
    %s45 = sor.u32 %s43, %s44
    %p46 = scmp.eq.s32.totalorder %s45, 0
    %s48 = sadd.s32 %s47, 1
    %s49 = scalar_select %p46, %s47, %s48
    %p52 = pneg %p46
    %p53 = scmp.eq.s32.totalorder %s9, 1
    %p54 = por %p52, %p53
    %p55 = scmp.ne.s32.totalorder %s47, %s50
    %p56 = scmp.eq.s32.totalorder %s9, 0
    %p57 = por %p55, %p56
    %p58 = scmp.ne.s32.totalorder %s47, %s50
    %p59 = scmp.eq.s32.totalorder %s14, 1
    %p60 = por %p58, %p59
    %p61 = scmp.ne.s32.totalorder %s50, %s51
    %p62 = scmp.eq.s32.totalorder %s14, 0
    %p63 = por %p61, %p62
    %p64 = scmp.ne.s32.totalorder %s50, %s51
    %p65 = scmp.eq.s32.totalorder %s15, 1
    %p66 = por %p64, %p65
    %p68 = scmp.ne.s32.totalorder %s51, %s67
    %p69 = scmp.eq.s32.totalorder %s15, 0
    %p70 = por %p68, %p69
    %s71 = ssub.s32 %s18, %s34
    %p72 = scmp.eq.s32.totalorder %s71, 0
    %s74 = sadd.s32 %s73, 1
    %s75 = scalar_select %p72, %s73, %s74
    %p78 = pneg %p72
    %p79 = scmp.eq.s32.totalorder %s9, 1
    %p80 = por %p78, %p79
    %p81 = scmp.ne.s32.totalorder %s73, %s76
    %p82 = scmp.eq.s32.totalorder %s9, 0
    %p83 = por %p81, %p82
    %p84 = scmp.ne.s32.totalorder %s73, %s76
    %p85 = scmp.eq.s32.totalorder %s14, 1
    %p86 = por %p84, %p85
    %p87 = scmp.ne.s32.totalorder %s76, %s77
    %p88 = scmp.eq.s32.totalorder %s14, 0
    %p89 = por %p87, %p88
    %p90 = scmp.ne.s32.totalorder %s76, %s77
    %p91 = scmp.eq.s32.totalorder %s15, 1
    %p92 = por %p90, %p91
    %p94 = scmp.ne.s32.totalorder %s77, %s93
    %p95 = scmp.eq.s32.totalorder %s15, 0
    %p96 = por %p94, %p95
    %s97 = ssub.s32 %s18, %s34
    %p98 = scmp.eq.s32.totalorder %s97, 0
    %s100 = sadd.s32 %s99, 1
    %s101 = scalar_select %p98, %s99, %s100
    %p104 = pneg %p98
    %p105 = scmp.eq.s32.totalorder %s9, 1
    %p106 = por %p104, %p105
    %p107 = scmp.ne.s32.totalorder %s99, %s102
    %p108 = scmp.eq.s32.totalorder %s9, 0
    %p109 = por %p107, %p108
    %p110 = scmp.ne.s32.totalorder %s99, %s102
    %p111 = scmp.eq.s32.totalorder %s14, 1
    %p112 = por %p110, %p111
    %p113 = scmp.ne.s32.totalorder %s102, %s103
    %p114 = scmp.eq.s32.totalorder %s14, 0
    %p115 = por %p113, %p114
    %p116 = scmp.ne.s32.totalorder %s102, %s103
    %p117 = scmp.eq.s32.totalorder %s15, 1
    %p118 = por %p116, %p117
    %p120 = scmp.ne.s32.totalorder %s103, %s119
    %p121 = scmp.eq.s32.totalorder %s15, 0
    %p122 = por %p120, %p121
    %s123 = ssub.s32 %s16, %s42
    %s124 = ssub.s32 %s19, %s30
    %s125 = sor.u32 %s123, %s124
    %s126 = ssub.s32 %s17, %s38
    %s127 = sor.u32 %s125, %s126
    %s128 = ssub.s32 %s18, %s34
    %s129 = sor.u32 %s127, %s128
    %p130 = scmp.eq.s32.totalorder %s129, 0
    %s132 = sadd.s32 %s131, 1
    %s133 = scalar_select %p130, %s131, %s132
    %p136 = pneg %p130
    %p137 = scmp.eq.s32.totalorder %s9, 1
    %p138 = por %p136, %p137
    %p139 = scmp.ne.s32.totalorder %s131, %s134
    %p140 = scmp.eq.s32.totalorder %s9, 0
    %p141 = por %p139, %p140
    %p142 = scmp.ne.s32.totalorder %s131, %s134
    %p143 = scmp.eq.s32.totalorder %s14, 1
    %p144 = por %p142, %p143
    %p145 = scmp.ne.s32.totalorder %s134, %s135
    %p146 = scmp.eq.s32.totalorder %s14, 0
    %p147 = por %p145, %p146
    %p148 = scmp.ne.s32.totalorder %s134, %s135
    %p149 = scmp.eq.s32.totalorder %s15, 1
    %p150 = por %p148, %p149
    %p152 = scmp.ne.s32.totalorder %s135, %s151
    %p153 = scmp.eq.s32.totalorder %s15, 0
    %p154 = por %p152, %p153
    %p155 = scmp.le.s32.totalorder 1, %s9
    %p156 = scmp.lt.s32.totalorder %s9, 3
    %p157 = pnand %p155, %p156
    %p158 = pneg %p157
    // Predicated region
    $region9: #{equal_conv2d.1} parent=5 // pred_check
      _
    $region10: #{equal_conv2d.1} parent=5 // pred_check_branch
      %160 = sbr.rel (%p157) target = $region12
    $region11: #{equal_conv2d.1} parent=5 // pred_region
      %s161 = ssub.s32 %s9, 1
      // Predicated region
      $region13: #{equal_conv2d.1} parent=11 // pred_check
        %p162 = pneg %p89
      $region14: #{equal_conv2d.1} parent=11 // pred_check_branch
        %164 = sbr.rel (%p162) target = $region16
      $region15: #{equal_conv2d.1} parent=11 // pred_region
        %p165 = scmp.lt.s32.totalorder %s22, 0
        %s166 = scalar_select %p165, %s22, 0
        %s167 = smul.addr %s166, 4
        %s168 = scalar_lea.vmem %s1, %s167
      $region16: #{equal_conv2d.1} parent=11 // pred_fallthru
        _
      // Predicated region
      $region17: #{equal_conv2d.1} parent=11 // pred_check
        %p169 = pneg %p115
      $region18: #{equal_conv2d.1} parent=11 // pred_check_branch
        %171 = sbr.rel (%p169) target = $region20
      $region19: #{equal_conv2d.1} parent=11 // pred_region
        %p172 = scmp.lt.s32.totalorder %s22, 0
        %s173 = scalar_select %p172, %s22, 0
        %s174 = scalar_lea.vmem %s2, %s173
      $region20: #{equal_conv2d.1} parent=11 // pred_fallthru
        _
    $region12: #{equal_conv2d.1} parent=5 // pred_fallthru
      _
    %p175 = scmp.lt.s32.totalorder %s9, 2
    // Predicated region
    $region21: #{equal_conv2d.1} parent=5 // pred_check
      %p176 = pneg %p175
    $region22: #{equal_conv2d.1} parent=5 // pred_check_branch
      %178 = sbr.rel (%p176) target = $region24
    $region23: #{equal_conv2d.1} parent=5 // pred_region
      // Predicated region
      $region25: #{equal_conv2d.1} parent=23 // pred_check
        %p179 = pneg %p57
      $region26: #{equal_conv2d.1} parent=23 // pred_check_branch
        %181 = sbr.rel (%p179) target = $region28
      $region27: #{equal_conv2d.1} parent=23 // pred_region
        %s182 = smul.u32 2, %s17
        %p183 = scmp.lt.s32.totalorder %s16, 1
        %s184 = scalar_select %p183, %s16, 1
        %p185 = scmp.lt.s32.totalorder %s182, 1
        %s186 = scalar_select %p185, %s182, 1
        %s187 = smul.addr %s184, 36
        %s188 = sadd.s32 %s186, %s187
        %s189 = smul.addr %s188, 4
        %s190 = scalar_lea.vmem %s0, %s189
        %s191 = smul.u32 2, %s17
      $region28: #{equal_conv2d.1} parent=23 // pred_fallthru
        _
    $region24: #{equal_conv2d.1} parent=5 // pred_fallthru
      _
    %p192 = scmp.le.s32.totalorder 1, %s9
    %p193 = scmp.lt.s32.totalorder %s9, 3
    %p194 = pnand %p192, %p193
    %p195 = pneg %p194
    // Predicated region
    $region29: #{equal_conv2d.1} parent=5 // pred_check
      _
    $region30: #{equal_conv2d.1} parent=5 // pred_check_branch
      %197 = sbr.rel (%p194) target = $region32
    $region31: #{equal_conv2d.1} parent=5 // pred_region
      %s198 = ssub.s32 %s9, 1
      %s199 = smul.u32 2, %s21
      %p200 = scmp.lt.s32.totalorder %s20, 1
      %s201 = scalar_select %p200, %s20, 1
      %p202 = scmp.lt.s32.totalorder %s199, 1
      %s203 = scalar_select %p202, %s199, 1
      %s204 = smul.addr %s201, 36
      %s205 = sadd.s32 %s203, %s204
      %s206 = smul.addr %s205, 4
      %s207 = scalar_lea.vmem %s0, %s206
      %p208 = pneg %p63
      %p209 = pneg %p60
      %p210 = scmp.lt.s32.totalorder %s22, 0
      %s211 = scalar_select %p210, %s22, 0
      %s212 = smul.addr %s211, 4
      %s213 = scalar_lea.vmem %s1, %s212
      %p214 = pneg %p89
      %p215 = pneg %p86
      %p216 = scmp.lt.s32.totalorder %s22, 0
      %s217 = scalar_select %p216, %s22, 0
      %s218 = scalar_lea.vmem %s2, %s217
      %p219 = pneg %p115
      %p220 = pneg %p112
      %p221 = pneg %p147
      %p222 = pneg %p144
      %s223 = smul.u32 16, %s23
      %s224 = smul.u32 2, %s21
      %p225 = scmp.lt.s32.totalorder %s20, 1
      %s226 = scalar_select %p225, %s20, 1
      %p227 = scmp.lt.s32.totalorder %s223, 15
      %s228 = scalar_select %p227, %s223, 15
      %p229 = scmp.lt.s32.totalorder %s224, 1
      %s230 = scalar_select %p229, %s224, 1
      %p231 = scmp.lt.s32.totalorder %s22, 0
      %s232 = scalar_select %p231, %s22, 0
      %s233 = sadd.s32 %s232, %s230
      %s234 = smul.addr %s228, 2
      %s235 = sadd.s32 %s233, %s234
      %s236 = smul.addr %s226, 32
      %s237 = sadd.s32 %s235, %s236
      %s238 = smul.addr %s237, 4
      %s239 = scalar_lea.vmem %s3, %s238
      %s240 = smul.u32 2, %s21
      %p241 = scmp.lt.s32.totalorder %s20, 1
      %s242 = scalar_select %p241, %s20, 1
      %p243 = scmp.lt.s32.totalorder %s240, 1
      %s244 = scalar_select %p243, %s240, 1
      %s245 = smul.addr %s242, 36
      %s246 = sadd.s32 %s244, %s245
      %s247 = smul.addr %s246, 4
      %s248 = scalar_lea.vmem %s0, %s247
      %s249 = smul.u32 2, %s21
      %p250 = scmp.lt.s32.totalorder %s22, 0
      %s251 = scalar_select %p250, %s22, 0
      %s252 = smul.addr %s251, 4
      %s253 = scalar_lea.vmem %s1, %s252
      %p254 = scmp.lt.s32.totalorder %s22, 0
      %s255 = scalar_select %p254, %s22, 0
      %s256 = scalar_lea.vmem %s2, %s255
      %s257 = smul.u32 16, %s23
      %s258 = smul.u32 2, %s21
      %p259 = scmp.lt.s32.totalorder %s20, 1
      %s260 = scalar_select %p259, %s20, 1
      %p261 = scmp.lt.s32.totalorder %s257, 15
      %s262 = scalar_select %p261, %s257, 15
      %p263 = scmp.lt.s32.totalorder %s258, 1
      %s264 = scalar_select %p263, %s258, 1
      %p265 = scmp.lt.s32.totalorder %s22, 0
      %s266 = scalar_select %p265, %s22, 0
      %s267 = sadd.s32 %s266, %s264
      %s268 = smul.addr %s262, 2
      %s269 = sadd.s32 %s267, %s268
      %s270 = smul.addr %s260, 32
      %s271 = sadd.s32 %s269, %s270
      %s272 = smul.addr %s271, 4
      %s273 = scalar_lea.vmem %s3, %s272
      %s274 = smul.u32 16, %s23
      %s275 = smul.u32 2, %s21
      %s277 = smul.u32 %s23, 16
      %s278 = smul.u32 %s277, 2
      %s279 = smul.addr %s278, 4
      %s280 = scalar_lea.vmem %s248, %s279
      %v281 = vld [vmem:[%s280] sm:$0xf]
      %v282 = vld [vmem:[%s280 + $0x4] sm:$0xf]
      %v283 = vld [vmem:[%s280 + $0x8] sm:$0xf]
      %v284 = vld [vmem:[%s280 + $0xc] sm:$0xf]
      %v285 = vld [vmem:[%s280 + $0x10] sm:$0xf]
      %v286 = vld [vmem:[%s280 + $0x14] sm:$0xf]
      %v287 = vld [vmem:[%s280 + $0x18] sm:$0xf]
      %v288 = vld [vmem:[%s280 + $0x1c] sm:$0xf]
      %v289 = vld [vmem:[%s280 + $0x20] sm:$0xf]
      %v290 = vld [vmem:[%s280 + $0x24] sm:$0xf]
      %v291 = vld [vmem:[%s280 + $0x28] sm:$0xf]
      %v292 = vld [vmem:[%s280 + $0x2c] sm:$0xf]
      %v293 = vld [vmem:[%s280 + $0x30] sm:$0xf]
      %v294 = vld [vmem:[%s280 + $0x34] sm:$0xf]
      %v295 = vld [vmem:[%s280 + $0x38] sm:$0xf]
      %v296 = vld [vmem:[%s280 + $0x3c] sm:$0xf]
      %v297 = vld [vmem:[%s280 + $0x40] sm:$0xf]
      %v298 = vld [vmem:[%s280 + $0x44] sm:$0xf]
      %v299 = vld [vmem:[%s280 + $0x48] sm:$0xf]
      %v300 = vld [vmem:[%s280 + $0x4c] sm:$0xf]
      %v301 = vld [vmem:[%s280 + $0x50] sm:$0xf]
      %v302 = vld [vmem:[%s280 + $0x54] sm:$0xf]
      %v303 = vld [vmem:[%s280 + $0x58] sm:$0xf]
      %v304 = vld [vmem:[%s280 + $0x5c] sm:$0xf]
      %v305 = vld [vmem:[%s280 + $0x60] sm:$0xf]
      %v306 = vld [vmem:[%s280 + $0x64] sm:$0xf]
      %v307 = vld [vmem:[%s280 + $0x68] sm:$0xf]
      %v308 = vld [vmem:[%s280 + $0x6c] sm:$0xf]
      %v309 = vld [vmem:[%s280 + $0x70] sm:$0xf]
      %v310 = vld [vmem:[%s280 + $0x74] sm:$0xf]
      %v311 = vld [vmem:[%s280 + $0x78] sm:$0xf]
      %v312 = vld [vmem:[%s280 + $0x7c] sm:$0xf]
      %v313 = vld [vmem:[%s253] sm:$0xf]
      %v314 = vld [vmem:[%s253 + $0x4] sm:$0xf]
      %v315 = vld [vmem:[%s253 + $0x8] sm:$0xf]
      %s316 = sadd.s32 %s277, 1
      %s317 = smul.u32 %s316, 2
      %s318 = smul.addr %s317, 4
      %s319 = scalar_lea.vmem %s248, %s318
      %v320 = vld [vmem:[%s319] sm:$0xf]
      %v321 = vld [vmem:[%s319 + $0x4] sm:$0xf]
      %v322 = vld [vmem:[%s319 + $0x8] sm:$0xf]
      %v323 = vld [vmem:[%s319 + $0xc] sm:$0xf]
      %v324 = vld [vmem:[%s319 + $0x10] sm:$0xf]
      %v325 = vld [vmem:[%s319 + $0x14] sm:$0xf]
      %v326 = vld [vmem:[%s319 + $0x18] sm:$0xf]
      %v327 = vld [vmem:[%s319 + $0x1c] sm:$0xf]
      %v328 = vld [vmem:[%s319 + $0x20] sm:$0xf]
      %v329 = vld [vmem:[%s319 + $0x24] sm:$0xf]
      %v330 = vld [vmem:[%s319 + $0x28] sm:$0xf]
      %v331 = vld [vmem:[%s319 + $0x2c] sm:$0xf]
      %v332 = vld [vmem:[%s319 + $0x30] sm:$0xf]
      %v333 = vld [vmem:[%s319 + $0x34] sm:$0xf]
      %v334 = vld [vmem:[%s319 + $0x38] sm:$0xf]
      %v335 = vld [vmem:[%s319 + $0x3c] sm:$0xf]
      %v336 = vld [vmem:[%s319 + $0x40] sm:$0xf]
      %v337 = vld [vmem:[%s319 + $0x44] sm:$0xf]
      %v338 = vld [vmem:[%s319 + $0x48] sm:$0xf]
      %v339 = vld [vmem:[%s319 + $0x4c] sm:$0xf]
      %v340 = vld [vmem:[%s319 + $0x50] sm:$0xf]
      %v341 = vld [vmem:[%s319 + $0x54] sm:$0xf]
      %v342 = vld [vmem:[%s319 + $0x58] sm:$0xf]
      %v343 = vld [vmem:[%s319 + $0x5c] sm:$0xf]
      %v344 = vld [vmem:[%s319 + $0x60] sm:$0xf]
      %v345 = vld [vmem:[%s319 + $0x64] sm:$0xf]
      %v346 = vld [vmem:[%s319 + $0x68] sm:$0xf]
      %v347 = vld [vmem:[%s319 + $0x6c] sm:$0xf]
      %v348 = vld [vmem:[%s319 + $0x70] sm:$0xf]
      %v349 = vld [vmem:[%s319 + $0x74] sm:$0xf]
      %v350 = vld [vmem:[%s319 + $0x78] sm:$0xf]
      %v351 = vld [vmem:[%s319 + $0x7c] sm:$0xf]
      %s352 = scalar_lea.vmem %s253, 12
      %v353 = vld [vmem:[%s352] sm:$0xf]
      %v354 = vld [vmem:[%s352 + $0x4] sm:$0xf]
      %v355 = vld [vmem:[%s352 + $0x8] sm:$0xf]
      %v388 = vunpack.c.l.b16 %v320
      %v389 = vunpack.c.l.b16 %v321
      %v390 = vunpack.c.l.b16 %v322
      %v391 = vunpack.c.l.b16 %v323
      %v392 = vunpack.c.l.b16 %v324
      %v393 = vunpack.c.l.b16 %v325
      %v394 = vunpack.c.l.b16 %v326
      %v395 = vunpack.c.l.b16 %v327
      %v396 = vunpack.c.l.b16 %v328
      %v397 = vunpack.c.l.b16 %v329
      %v398 = vunpack.c.l.b16 %v330
      %v399 = vunpack.c.l.b16 %v331
      %v400 = vunpack.c.l.b16 %v332
      %v401 = vunpack.c.l.b16 %v333
      %v402 = vunpack.c.l.b16 %v334
      %v403 = vunpack.c.l.b16 %v335
      %v404 = vunpack.c.l.b16 %v336
      %v405 = vunpack.c.l.b16 %v337
      %v406 = vunpack.c.l.b16 %v338
      %v407 = vunpack.c.l.b16 %v339
      %v408 = vunpack.c.l.b16 %v340
      %v409 = vunpack.c.l.b16 %v341
      %v410 = vunpack.c.l.b16 %v342
      %v411 = vunpack.c.l.b16 %v343
      %v412 = vunpack.c.l.b16 %v344
      %v413 = vunpack.c.l.b16 %v345
      %v414 = vunpack.c.l.b16 %v346
      %v415 = vunpack.c.l.b16 %v347
      %v416 = vunpack.c.l.b16 %v348
      %v417 = vunpack.c.l.b16 %v349
      %v418 = vunpack.c.l.b16 %v350
      %v419 = vunpack.c.l.b16 %v351
      %v420 = vpack.c.b16 %v389, %v388
      %v421 = vpack.c.b16 %v391, %v390
      %v422 = vpack.c.b16 %v393, %v392
      %v423 = vpack.c.b16 %v395, %v394
      %v424 = vpack.c.b16 %v397, %v396
      %v425 = vpack.c.b16 %v399, %v398
      %v426 = vpack.c.b16 %v401, %v400
      %v427 = vpack.c.b16 %v403, %v402
      %v428 = vpack.c.b16 %v405, %v404
      %v429 = vpack.c.b16 %v407, %v406
      %v430 = vpack.c.b16 %v409, %v408
      %v431 = vpack.c.b16 %v411, %v410
      %v432 = vpack.c.b16 %v413, %v412
      %v433 = vpack.c.b16 %v415, %v414
      %v434 = vpack.c.b16 %v417, %v416
      %v435 = vpack.c.b16 %v419, %v418
      %v439 = vunpack.c.l.b16 %v353
      %v440 = vunpack.c.l.b16 %v354
      %v441 = vunpack.c.l.b16 %v355
      %v442 = vpack.c.b16 %v440, %v439
      %v443 = vpack.c.b16 %v441, %v441
      %vm445 = vcmask 195584
      %v447 = vsel %vm445, %v420, 0
      %v450 = vsel %vm445, %v421, 0
      %v453 = vsel %vm445, %v422, 0
      %v456 = vsel %vm445, %v423, 0
      %v459 = vsel %vm445, %v424, 0
      %v462 = vsel %vm445, %v425, 0
      %v465 = vsel %vm445, %v426, 0
      %v468 = vsel %vm445, %v427, 0
      %v471 = vsel %vm445, %v428, 0
      %v474 = vsel %vm445, %v429, 0
      %v477 = vsel %vm445, %v430, 0
      %v480 = vsel %vm445, %v431, 0
      %v483 = vsel %vm445, %v432, 0
      %v486 = vsel %vm445, %v433, 0
      %v489 = vsel %vm445, %v434, 0
      %v492 = vsel %vm445, %v435, 0
      %vm494 = vcmask 1043456
      %v496 = vsel %vm494, %v443, 0
      %498 = vmatprep.subr.bf16.mxu0 0
      %499 = vmatpush1.bf16.msra.mxu0 0
      %500 = vmatprep.subr.bf16.mxu0 0
      %501 = vmatpush1.bf16.msra.mxu0 0
      %502 = vmatprep.subr.bf16.mxu0 0
      %503 = vmatpush1.bf16.msra.mxu0 0
      %504 = vmatprep.subr.bf16.mxu0 0
      %505 = vmatpush1.bf16.msra.mxu0 0
      %506 = vmatprep.subr.bf16.mxu0 0
      %507 = vmatpush1.bf16.msra.mxu0 0
      %508 = vmatprep.subr.bf16.mxu0 0
      %509 = vmatpush1.bf16.msra.mxu0 0
      %510 = vmatprep.subr.bf16.mxu0 0
      %511 = vmatpush1.bf16.msra.mxu0 %v496
      %512 = vmatprep.subr.bf16.mxu0 0
      %513 = vmatpush1.bf16.msra.mxu0 %v442
      %514 = vmatprep.subr.bf16.mxu0 0
      %515 = vmatpush2.bf16.msra.mxu0 0
      %516 = vmatprep.subr.bf16.mxu0 0
      %517 = vmatpush2.bf16.msra.mxu0 0
      %518 = vmatprep.subr.bf16.mxu0 0
      %519 = vmatpush2.bf16.msra.mxu0 0
      %520 = vmatprep.subr.bf16.mxu0 0
      %521 = vmatpush2.bf16.msra.mxu0 0
      %522 = vmatprep.subr.bf16.mxu0 0
      %523 = vmatpush2.bf16.msra.mxu0 0
      %524 = vmatprep.subr.bf16.mxu0 0
      %525 = vmatpush2.bf16.msra.mxu0 0
      %526 = vmatprep.subr.bf16.mxu0 0
      %527 = vmatpush2.bf16.msra.mxu0 0
      %528 = vmatprep.subr.bf16.mxu0 0
      %529 = vmatpush2.bf16.msra.mxu0 0
      %530 = vmatprep.mubr.bf16.mxu0 0
      %531 = vmatmul.mubr.bf16.gmra.mxu0 %v447
      %v532 = vpop.f32.mrf.mxu0
      %v533 = vadd.f32 0.0, %v532
      %v534 = vpop.f32.mrf.mxu0
      %v535 = vpop.f32.mrf.mxu0
      %v536 = vadd.f32 0.0, %v535
      %v537 = vpop.f32.mrf.mxu0
      %538 = vmatprep.mubr.bf16.mxu0 0
      %539 = vmatmul.mubr.bf16.gmra.mxu0 %v450
      %v540 = vpop.f32.mrf.mxu0
      %v541 = vadd.f32 0.0, %v540
      %v542 = vpop.f32.mrf.mxu0
      %v543 = vpop.f32.mrf.mxu0
      %v544 = vadd.f32 0.0, %v543
      %v545 = vpop.f32.mrf.mxu0
      %546 = vmatprep.mubr.bf16.mxu0 0
      %547 = vmatmul.mubr.bf16.gmra.mxu0 %v453
      %v548 = vpop.f32.mrf.mxu0
      %v549 = vadd.f32 0.0, %v548
      %v550 = vpop.f32.mrf.mxu0
      %v551 = vpop.f32.mrf.mxu0
      %v552 = vadd.f32 0.0, %v551
      %v553 = vpop.f32.mrf.mxu0
      %554 = vmatprep.mubr.bf16.mxu0 0
      %555 = vmatmul.mubr.bf16.gmra.mxu0 %v456
      %v556 = vpop.f32.mrf.mxu0
      %v557 = vadd.f32 0.0, %v556
      %v558 = vpop.f32.mrf.mxu0
      %v559 = vpop.f32.mrf.mxu0
      %v560 = vadd.f32 0.0, %v559
      %v561 = vpop.f32.mrf.mxu0
      %562 = vmatprep.mubr.bf16.mxu0 0
      %563 = vmatmul.mubr.bf16.gmra.mxu0 %v459
      %v564 = vpop.f32.mrf.mxu0
      %v565 = vadd.f32 0.0, %v564
      %v566 = vpop.f32.mrf.mxu0
      %v567 = vpop.f32.mrf.mxu0
      %v568 = vadd.f32 0.0, %v567
      %v569 = vpop.f32.mrf.mxu0
      %570 = vmatprep.mubr.bf16.mxu0 0
      %571 = vmatmul.mubr.bf16.gmra.mxu0 %v462
      %v572 = vpop.f32.mrf.mxu0
      %v573 = vadd.f32 0.0, %v572
      %v574 = vpop.f32.mrf.mxu0
      %v575 = vpop.f32.mrf.mxu0
      %v576 = vadd.f32 0.0, %v575
      %v577 = vpop.f32.mrf.mxu0
      %578 = vmatprep.mubr.bf16.mxu0 0
      %579 = vmatmul.mubr.bf16.gmra.mxu0 %v465
      %v580 = vpop.f32.mrf.mxu0
      %v581 = vadd.f32 0.0, %v580
      %v582 = vpop.f32.mrf.mxu0
      %v583 = vpop.f32.mrf.mxu0
      %v584 = vadd.f32 0.0, %v583
      %v585 = vpop.f32.mrf.mxu0
      %586 = vmatprep.mubr.bf16.mxu0 0
      %587 = vmatmul.mubr.bf16.gmra.mxu0 %v468
      %v588 = vpop.f32.mrf.mxu0
      %v589 = vadd.f32 0.0, %v588
      %v590 = vpop.f32.mrf.mxu0
      %v591 = vpop.f32.mrf.mxu0
      %v592 = vadd.f32 0.0, %v591
      %v593 = vpop.f32.mrf.mxu0
      %594 = vmatprep.mubr.bf16.mxu0 0
      %595 = vmatmul.mubr.bf16.gmra.mxu0 %v471
      %v596 = vpop.f32.mrf.mxu0
      %v597 = vadd.f32 0.0, %v596
      %v598 = vpop.f32.mrf.mxu0
      %v599 = vpop.f32.mrf.mxu0
      %v600 = vadd.f32 0.0, %v599
      %v601 = vpop.f32.mrf.mxu0
      %602 = vmatprep.mubr.bf16.mxu0 0
      %603 = vmatmul.mubr.bf16.gmra.mxu0 %v474
      %v604 = vpop.f32.mrf.mxu0
      %v605 = vadd.f32 0.0, %v604
      %v606 = vpop.f32.mrf.mxu0
      %v607 = vpop.f32.mrf.mxu0
      %v608 = vadd.f32 0.0, %v607
      %v609 = vpop.f32.mrf.mxu0
      %610 = vmatprep.mubr.bf16.mxu0 0
      %611 = vmatmul.mubr.bf16.gmra.mxu0 %v477
      %v612 = vpop.f32.mrf.mxu0
      %v613 = vadd.f32 0.0, %v612
      %v614 = vpop.f32.mrf.mxu0
      %v615 = vpop.f32.mrf.mxu0
      %v616 = vadd.f32 0.0, %v615
      %v617 = vpop.f32.mrf.mxu0
      %618 = vmatprep.mubr.bf16.mxu0 0
      %619 = vmatmul.mubr.bf16.gmra.mxu0 %v480
      %v620 = vpop.f32.mrf.mxu0
      %v621 = vadd.f32 0.0, %v620
      %v622 = vpop.f32.mrf.mxu0
      %v623 = vpop.f32.mrf.mxu0
      %v624 = vadd.f32 0.0, %v623
      %v625 = vpop.f32.mrf.mxu0
      %626 = vmatprep.mubr.bf16.mxu0 0
      %627 = vmatmul.mubr.bf16.gmra.mxu0 %v483
      %v628 = vpop.f32.mrf.mxu0
      %v629 = vadd.f32 0.0, %v628
      %v630 = vpop.f32.mrf.mxu0
      %v631 = vpop.f32.mrf.mxu0
      %v632 = vadd.f32 0.0, %v631
      %v633 = vpop.f32.mrf.mxu0
      %634 = vmatprep.mubr.bf16.mxu0 0
      %635 = vmatmul.mubr.bf16.gmra.mxu0 %v486
      %v636 = vpop.f32.mrf.mxu0
      %v637 = vadd.f32 0.0, %v636
      %v638 = vpop.f32.mrf.mxu0
      %v639 = vpop.f32.mrf.mxu0
      %v640 = vadd.f32 0.0, %v639
      %v641 = vpop.f32.mrf.mxu0
      %642 = vmatprep.mubr.bf16.mxu0 0
      %643 = vmatmul.mubr.bf16.gmra.mxu0 %v489
      %v644 = vpop.f32.mrf.mxu0
      %v645 = vadd.f32 0.0, %v644
      %v646 = vpop.f32.mrf.mxu0
      %v647 = vpop.f32.mrf.mxu0
      %v648 = vadd.f32 0.0, %v647
      %v649 = vpop.f32.mrf.mxu0
      %650 = vmatprep.mubr.bf16.mxu0 0
      %651 = vmatmul.mubr.bf16.gmra.mxu0 %v492
      %v652 = vpop.f32.mrf.mxu0
      %v653 = vadd.f32 0.0, %v652
      %v654 = vpop.f32.mrf.mxu0
      %v655 = vpop.f32.mrf.mxu0
      %v656 = vadd.f32 0.0, %v655
      %v657 = vpop.f32.mrf.mxu0
      %658 = vdwg.mxu0
      %v691 = vunpack.c.l.b16 %v281
      %v692 = vunpack.c.l.b16 %v282
      %v693 = vunpack.c.l.b16 %v283
      %v694 = vunpack.c.l.b16 %v284
      %v695 = vunpack.c.l.b16 %v285
      %v696 = vunpack.c.l.b16 %v286
      %v697 = vunpack.c.l.b16 %v287
      %v698 = vunpack.c.l.b16 %v288
      %v699 = vunpack.c.l.b16 %v289
      %v700 = vunpack.c.l.b16 %v290
      %v701 = vunpack.c.l.b16 %v291
      %v702 = vunpack.c.l.b16 %v292
      %v703 = vunpack.c.l.b16 %v293
      %v704 = vunpack.c.l.b16 %v294
      %v705 = vunpack.c.l.b16 %v295
      %v706 = vunpack.c.l.b16 %v296
      %v707 = vunpack.c.l.b16 %v297
      %v708 = vunpack.c.l.b16 %v298
      %v709 = vunpack.c.l.b16 %v299
      %v710 = vunpack.c.l.b16 %v300
      %v711 = vunpack.c.l.b16 %v301
      %v712 = vunpack.c.l.b16 %v302
      %v713 = vunpack.c.l.b16 %v303
      %v714 = vunpack.c.l.b16 %v304
      %v715 = vunpack.c.l.b16 %v305
      %v716 = vunpack.c.l.b16 %v306
      %v717 = vunpack.c.l.b16 %v307
      %v718 = vunpack.c.l.b16 %v308
      %v719 = vunpack.c.l.b16 %v309
      %v720 = vunpack.c.l.b16 %v310
      %v721 = vunpack.c.l.b16 %v311
      %v722 = vunpack.c.l.b16 %v312
      %v723 = vpack.c.b16 %v692, %v691
      %v724 = vpack.c.b16 %v694, %v693
      %v725 = vpack.c.b16 %v696, %v695
      %v726 = vpack.c.b16 %v698, %v697
      %v727 = vpack.c.b16 %v700, %v699
      %v728 = vpack.c.b16 %v702, %v701
      %v729 = vpack.c.b16 %v704, %v703
      %v730 = vpack.c.b16 %v706, %v705
      %v731 = vpack.c.b16 %v708, %v707
      %v732 = vpack.c.b16 %v710, %v709
      %v733 = vpack.c.b16 %v712, %v711
      %v734 = vpack.c.b16 %v714, %v713
      %v735 = vpack.c.b16 %v716, %v715
      %v736 = vpack.c.b16 %v718, %v717
      %v737 = vpack.c.b16 %v720, %v719
      %v738 = vpack.c.b16 %v722, %v721
      %v742 = vunpack.c.l.b16 %v313
      %v743 = vunpack.c.l.b16 %v314
      %v744 = vunpack.c.l.b16 %v315
      %v745 = vpack.c.b16 %v743, %v742
      %v746 = vpack.c.b16 %v744, %v744
      %v749 = vsel %vm445, %v723, 0
      %v752 = vsel %vm445, %v724, 0
      %v755 = vsel %vm445, %v725, 0
      %v758 = vsel %vm445, %v726, 0
      %v761 = vsel %vm445, %v727, 0
      %v764 = vsel %vm445, %v728, 0
      %v767 = vsel %vm445, %v729, 0
      %v770 = vsel %vm445, %v730, 0
      %v773 = vsel %vm445, %v731, 0
      %v776 = vsel %vm445, %v732, 0
      %v779 = vsel %vm445, %v733, 0
      %v782 = vsel %vm445, %v734, 0
      %v785 = vsel %vm445, %v735, 0
      %v788 = vsel %vm445, %v736, 0
      %v791 = vsel %vm445, %v737, 0
      %v794 = vsel %vm445, %v738, 0
      %v797 = vsel %vm494, %v746, 0
      %799 = vmatprep.subr.bf16.mxu0 0
      %800 = vmatpush1.bf16.msra.mxu0 0
      %801 = vmatprep.subr.bf16.mxu0 0
      %802 = vmatpush1.bf16.msra.mxu0 0
      %803 = vmatprep.subr.bf16.mxu0 0
      %804 = vmatpush1.bf16.msra.mxu0 0
      %805 = vmatprep.subr.bf16.mxu0 0
      %806 = vmatpush1.bf16.msra.mxu0 0
      %807 = vmatprep.subr.bf16.mxu0 0
      %808 = vmatpush1.bf16.msra.mxu0 0
      %809 = vmatprep.subr.bf16.mxu0 0
      %810 = vmatpush1.bf16.msra.mxu0 0
      %811 = vmatprep.subr.bf16.mxu0 0
      %812 = vmatpush1.bf16.msra.mxu0 %v797
      %813 = vmatprep.subr.bf16.mxu0 0
      %814 = vmatpush1.bf16.msra.mxu0 %v745
      %815 = vmatprep.subr.bf16.mxu0 0
      %816 = vmatpush2.bf16.msra.mxu0 0
      %817 = vmatprep.subr.bf16.mxu0 0
      %818 = vmatpush2.bf16.msra.mxu0 0
      %819 = vmatprep.subr.bf16.mxu0 0
      %820 = vmatpush2.bf16.msra.mxu0 0
      %821 = vmatprep.subr.bf16.mxu0 0
      %822 = vmatpush2.bf16.msra.mxu0 0
      %823 = vmatprep.subr.bf16.mxu0 0
      %824 = vmatpush2.bf16.msra.mxu0 0
      %825 = vmatprep.subr.bf16.mxu0 0
      %826 = vmatpush2.bf16.msra.mxu0 0
      %827 = vmatprep.subr.bf16.mxu0 0
      %828 = vmatpush2.bf16.msra.mxu0 0
      %829 = vmatprep.subr.bf16.mxu0 0
      %830 = vmatpush2.bf16.msra.mxu0 0
      %831 = vmatprep.mubr.bf16.mxu0 0
      %832 = vmatmul.mubr.bf16.gmra.mxu0 %v749
      %v833 = vpop.f32.mrf.mxu0
      %v834 = vadd.f32 %v533, %v833
      %v835 = vpop.f32.mrf.mxu0
      %v836 = vpop.f32.mrf.mxu0
      %v837 = vadd.f32 %v536, %v836
      %v838 = vpop.f32.mrf.mxu0
      %839 = vmatprep.mubr.bf16.mxu0 0
      %840 = vmatmul.mubr.bf16.gmra.mxu0 %v752
      %v841 = vpop.f32.mrf.mxu0
      %v842 = vadd.f32 %v541, %v841
      %v843 = vpop.f32.mrf.mxu0
      %v844 = vpop.f32.mrf.mxu0
      %v845 = vadd.f32 %v544, %v844
      %v846 = vpop.f32.mrf.mxu0
      %847 = vmatprep.mubr.bf16.mxu0 0
      %848 = vmatmul.mubr.bf16.gmra.mxu0 %v755
      %v849 = vpop.f32.mrf.mxu0
      %v850 = vadd.f32 %v549, %v849
      %v851 = vpop.f32.mrf.mxu0
      %v852 = vpop.f32.mrf.mxu0
      %v853 = vadd.f32 %v552, %v852
      %v854 = vpop.f32.mrf.mxu0
      %855 = vmatprep.mubr.bf16.mxu0 0
      %856 = vmatmul.mubr.bf16.gmra.mxu0 %v758
      %v857 = vpop.f32.mrf.mxu0
      %v858 = vadd.f32 %v557, %v857
      %v859 = vpop.f32.mrf.mxu0
      %v860 = vpop.f32.mrf.mxu0
      %v861 = vadd.f32 %v560, %v860
      %v862 = vpop.f32.mrf.mxu0
      %863 = vmatprep.mubr.bf16.mxu0 0
      %864 = vmatmul.mubr.bf16.gmra.mxu0 %v761
      %v865 = vpop.f32.mrf.mxu0
      %v866 = vadd.f32 %v565, %v865
      %v867 = vpop.f32.mrf.mxu0
      %v868 = vpop.f32.mrf.mxu0
      %v869 = vadd.f32 %v568, %v868
      %v870 = vpop.f32.mrf.mxu0
      %871 = vmatprep.mubr.bf16.mxu0 0
      %872 = vmatmul.mubr.bf16.gmra.mxu0 %v764
      %v873 = vpop.f32.mrf.mxu0
      %v874 = vadd.f32 %v573, %v873
      %v875 = vpop.f32.mrf.mxu0
      %v876 = vpop.f32.mrf.mxu0
      %v877 = vadd.f32 %v576, %v876
      %v878 = vpop.f32.mrf.mxu0
      %879 = vmatprep.mubr.bf16.mxu0 0
      %880 = vmatmul.mubr.bf16.gmra.mxu0 %v767
      %v881 = vpop.f32.mrf.mxu0
      %v882 = vadd.f32 %v581, %v881
      %v883 = vpop.f32.mrf.mxu0
      %v884 = vpop.f32.mrf.mxu0
      %v885 = vadd.f32 %v584, %v884
      %v886 = vpop.f32.mrf.mxu0
      %887 = vmatprep.mubr.bf16.mxu0 0
      %888 = vmatmul.mubr.bf16.gmra.mxu0 %v770
      %v889 = vpop.f32.mrf.mxu0
      %v890 = vadd.f32 %v589, %v889
      %v891 = vpop.f32.mrf.mxu0
      %v892 = vpop.f32.mrf.mxu0
      %v893 = vadd.f32 %v592, %v892
      %v894 = vpop.f32.mrf.mxu0
      %895 = vmatprep.mubr.bf16.mxu0 0
      %896 = vmatmul.mubr.bf16.gmra.mxu0 %v773
      %v897 = vpop.f32.mrf.mxu0
      %v898 = vadd.f32 %v597, %v897
      %v899 = vpop.f32.mrf.mxu0
      %v900 = vpop.f32.mrf.mxu0
      %v901 = vadd.f32 %v600, %v900
      %v902 = vpop.f32.mrf.mxu0
      %903 = vmatprep.mubr.bf16.mxu0 0
      %904 = vmatmul.mubr.bf16.gmra.mxu0 %v776
      %v905 = vpop.f32.mrf.mxu0
      %v906 = vadd.f32 %v605, %v905
      %v907 = vpop.f32.mrf.mxu0
      %v908 = vpop.f32.mrf.mxu0
      %v909 = vadd.f32 %v608, %v908
      %v910 = vpop.f32.mrf.mxu0
      %911 = vmatprep.mubr.bf16.mxu0 0
      %912 = vmatmul.mubr.bf16.gmra.mxu0 %v779
      %v913 = vpop.f32.mrf.mxu0
      %v914 = vadd.f32 %v613, %v913
      %v915 = vpop.f32.mrf.mxu0
      %v916 = vpop.f32.mrf.mxu0
      %v917 = vadd.f32 %v616, %v916
      %v918 = vpop.f32.mrf.mxu0
      %919 = vmatprep.mubr.bf16.mxu0 0
      %920 = vmatmul.mubr.bf16.gmra.mxu0 %v782
      %v921 = vpop.f32.mrf.mxu0
      %v922 = vadd.f32 %v621, %v921
      %v923 = vpop.f32.mrf.mxu0
      %v924 = vpop.f32.mrf.mxu0
      %v925 = vadd.f32 %v624, %v924
      %v926 = vpop.f32.mrf.mxu0
      %927 = vmatprep.mubr.bf16.mxu0 0
      %928 = vmatmul.mubr.bf16.gmra.mxu0 %v785
      %v929 = vpop.f32.mrf.mxu0
      %v930 = vadd.f32 %v629, %v929
      %v931 = vpop.f32.mrf.mxu0
      %v932 = vpop.f32.mrf.mxu0
      %v933 = vadd.f32 %v632, %v932
      %v934 = vpop.f32.mrf.mxu0
      %935 = vmatprep.mubr.bf16.mxu0 0
      %936 = vmatmul.mubr.bf16.gmra.mxu0 %v788
      %v937 = vpop.f32.mrf.mxu0
      %v938 = vadd.f32 %v637, %v937
      %v939 = vpop.f32.mrf.mxu0
      %v940 = vpop.f32.mrf.mxu0
      %v941 = vadd.f32 %v640, %v940
      %v942 = vpop.f32.mrf.mxu0
      %943 = vmatprep.mubr.bf16.mxu0 0
      %944 = vmatmul.mubr.bf16.gmra.mxu0 %v791
      %v945 = vpop.f32.mrf.mxu0
      %v946 = vadd.f32 %v645, %v945
      %v947 = vpop.f32.mrf.mxu0
      %v948 = vpop.f32.mrf.mxu0
      %v949 = vadd.f32 %v648, %v948
      %v950 = vpop.f32.mrf.mxu0
      %951 = vmatprep.mubr.bf16.mxu0 0
      %952 = vmatmul.mubr.bf16.gmra.mxu0 %v794
      %v953 = vpop.f32.mrf.mxu0
      %v954 = vadd.f32 %v653, %v953
      %v955 = vpop.f32.mrf.mxu0
      %v956 = vpop.f32.mrf.mxu0
      %v957 = vadd.f32 %v656, %v956
      %v958 = vpop.f32.mrf.mxu0
      %959 = vdwg.mxu0
      %s960 = sadd.s32 %s277, 2
      %s961 = smul.u32 %s960, 2
      %s962 = smul.addr %s961, 4
      %s963 = scalar_lea.vmem %s248, %s962
      %v964 = vld [vmem:[%s963] sm:$0xf]
      %v965 = vld [vmem:[%s963 + $0x4] sm:$0xf]
      %v966 = vld [vmem:[%s963 + $0x8] sm:$0xf]
      %v967 = vld [vmem:[%s963 + $0xc] sm:$0xf]
      %v968 = vld [vmem:[%s963 + $0x10] sm:$0xf]
      %v969 = vld [vmem:[%s963 + $0x14] sm:$0xf]
      %v970 = vld [vmem:[%s963 + $0x18] sm:$0xf]
      %v971 = vld [vmem:[%s963 + $0x1c] sm:$0xf]
      %v972 = vld [vmem:[%s963 + $0x20] sm:$0xf]
      %v973 = vld [vmem:[%s963 + $0x24] sm:$0xf]
      %v974 = vld [vmem:[%s963 + $0x28] sm:$0xf]
      %v975 = vld [vmem:[%s963 + $0x2c] sm:$0xf]
      %v976 = vld [vmem:[%s963 + $0x30] sm:$0xf]
      %v977 = vld [vmem:[%s963 + $0x34] sm:$0xf]
      %v978 = vld [vmem:[%s963 + $0x38] sm:$0xf]
      %v979 = vld [vmem:[%s963 + $0x3c] sm:$0xf]
      %v980 = vld [vmem:[%s963 + $0x40] sm:$0xf]
      %v981 = vld [vmem:[%s963 + $0x44] sm:$0xf]
      %v982 = vld [vmem:[%s963 + $0x48] sm:$0xf]
      %v983 = vld [vmem:[%s963 + $0x4c] sm:$0xf]
      %v984 = vld [vmem:[%s963 + $0x50] sm:$0xf]
      %v985 = vld [vmem:[%s963 + $0x54] sm:$0xf]
      %v986 = vld [vmem:[%s963 + $0x58] sm:$0xf]
      %v987 = vld [vmem:[%s963 + $0x5c] sm:$0xf]
      %v988 = vld [vmem:[%s963 + $0x60] sm:$0xf]
      %v989 = vld [vmem:[%s963 + $0x64] sm:$0xf]
      %v990 = vld [vmem:[%s963 + $0x68] sm:$0xf]
      %v991 = vld [vmem:[%s963 + $0x6c] sm:$0xf]
      %v992 = vld [vmem:[%s963 + $0x70] sm:$0xf]
      %v993 = vld [vmem:[%s963 + $0x74] sm:$0xf]
      %v994 = vld [vmem:[%s963 + $0x78] sm:$0xf]
      %v995 = vld [vmem:[%s963 + $0x7c] sm:$0xf]
      %s996 = scalar_lea.vmem %s253, 24
      %v997 = vld [vmem:[%s996] sm:$0xf]
      %v998 = vld [vmem:[%s996 + $0x4] sm:$0xf]
      %v999 = vld [vmem:[%s996 + $0x8] sm:$0xf]
      %v1032 = vunpack.c.l.b16 %v964
      %v1033 = vunpack.c.l.b16 %v965
      %v1034 = vunpack.c.l.b16 %v966
      %v1035 = vunpack.c.l.b16 %v967
      %v1036 = vunpack.c.l.b16 %v968
      %v1037 = vunpack.c.l.b16 %v969
      %v1038 = vunpack.c.l.b16 %v970
      %v1039 = vunpack.c.l.b16 %v971
      %v1040 = vunpack.c.l.b16 %v972
      %v1041 = vunpack.c.l.b16 %v973
      %v1042 = vunpack.c.l.b16 %v974
      %v1043 = vunpack.c.l.b16 %v975
      %v1044 = vunpack.c.l.b16 %v976
      %v1045 = vunpack.c.l.b16 %v977
      %v1046 = vunpack.c.l.b16 %v978
      %v1047 = vunpack.c.l.b16 %v979
      %v1048 = vunpack.c.l.b16 %v980
      %v1049 = vunpack.c.l.b16 %v981
      %v1050 = vunpack.c.l.b16 %v982
      %v1051 = vunpack.c.l.b16 %v983
      %v1052 = vunpack.c.l.b16 %v984
      %v1053 = vunpack.c.l.b16 %v985
      %v1054 = vunpack.c.l.b16 %v986
      %v1055 = vunpack.c.l.b16 %v987
      %v1056 = vunpack.c.l.b16 %v988
      %v1057 = vunpack.c.l.b16 %v989
      %v1058 = vunpack.c.l.b16 %v990
      %v1059 = vunpack.c.l.b16 %v991
      %v1060 = vunpack.c.l.b16 %v992
      %v1061 = vunpack.c.l.b16 %v993
      %v1062 = vunpack.c.l.b16 %v994
      %v1063 = vunpack.c.l.b16 %v995
      %v1064 = vpack.c.b16 %v1033, %v1032
      %v1065 = vpack.c.b16 %v1035, %v1034
      %v1066 = vpack.c.b16 %v1037, %v1036
      %v1067 = vpack.c.b16 %v1039, %v1038
      %v1068 = vpack.c.b16 %v1041, %v1040
      %v1069 = vpack.c.b16 %v1043, %v1042
      %v1070 = vpack.c.b16 %v1045, %v1044
      %v1071 = vpack.c.b16 %v1047, %v1046
      %v1072 = vpack.c.b16 %v1049, %v1048
      %v1073 = vpack.c.b16 %v1051, %v1050
      %v1074 = vpack.c.b16 %v1053, %v1052
      %v1075 = vpack.c.b16 %v1055, %v1054
      %v1076 = vpack.c.b16 %v1057, %v1056
      %v1077 = vpack.c.b16 %v1059, %v1058
      %v1078 = vpack.c.b16 %v1061, %v1060
      %v1079 = vpack.c.b16 %v1063, %v1062
      %v1083 = vunpack.c.l.b16 %v997
      %v1084 = vunpack.c.l.b16 %v998
      %v1085 = vunpack.c.l.b16 %v999
      %v1086 = vpack.c.b16 %v1084, %v1083
      %v1087 = vpack.c.b16 %v1085, %v1085
      %v1090 = vsel %vm445, %v1064, 0
      %v1093 = vsel %vm445, %v1065, 0
      %v1096 = vsel %vm445, %v1066, 0
      %v1099 = vsel %vm445, %v1067, 0
      %v1102 = vsel %vm445, %v1068, 0
      %v1105 = vsel %vm445, %v1069, 0
      %v1108 = vsel %vm445, %v1070, 0
      %v1111 = vsel %vm445, %v1071, 0
      %v1114 = vsel %vm445, %v1072, 0
      %v1117 = vsel %vm445, %v1073, 0
      %v1120 = vsel %vm445, %v1074, 0
      %v1123 = vsel %vm445, %v1075, 0
      %v1126 = vsel %vm445, %v1076, 0
      %v1129 = vsel %vm445, %v1077, 0
      %v1132 = vsel %vm445, %v1078, 0
      %v1135 = vsel %vm445, %v1079, 0
      %v1138 = vsel %vm494, %v1087, 0
      %1140 = vmatprep.subr.bf16.mxu0 0
      %1141 = vmatpush1.bf16.msra.mxu0 0
      %1142 = vmatprep.subr.bf16.mxu0 0
      %1143 = vmatpush1.bf16.msra.mxu0 0
      %1144 = vmatprep.subr.bf16.mxu0 0
      %1145 = vmatpush1.bf16.msra.mxu0 0
      %1146 = vmatprep.subr.bf16.mxu0 0
      %1147 = vmatpush1.bf16.msra.mxu0 0
      %1148 = vmatprep.subr.bf16.mxu0 0
      %1149 = vmatpush1.bf16.msra.mxu0 0
      %1150 = vmatprep.subr.bf16.mxu0 0
      %1151 = vmatpush1.bf16.msra.mxu0 0
      %1152 = vmatprep.subr.bf16.mxu0 0
      %1153 = vmatpush1.bf16.msra.mxu0 %v1138
      %1154 = vmatprep.subr.bf16.mxu0 0
      %1155 = vmatpush1.bf16.msra.mxu0 %v1086
      %1156 = vmatprep.subr.bf16.mxu0 0
      %1157 = vmatpush2.bf16.msra.mxu0 0
      %1158 = vmatprep.subr.bf16.mxu0 0
      %1159 = vmatpush2.bf16.msra.mxu0 0
      %1160 = vmatprep.subr.bf16.mxu0 0
      %1161 = vmatpush2.bf16.msra.mxu0 0
      %1162 = vmatprep.subr.bf16.mxu0 0
      %1163 = vmatpush2.bf16.msra.mxu0 0
      %1164 = vmatprep.subr.bf16.mxu0 0
      %1165 = vmatpush2.bf16.msra.mxu0 0
      %1166 = vmatprep.subr.bf16.mxu0 0
      %1167 = vmatpush2.bf16.msra.mxu0 0
      %1168 = vmatprep.subr.bf16.mxu0 0
      %1169 = vmatpush2.bf16.msra.mxu0 0
      %1170 = vmatprep.subr.bf16.mxu0 0
      %1171 = vmatpush2.bf16.msra.mxu0 0
      %1172 = vmatprep.mubr.bf16.mxu0 0
      %1173 = vmatmul.mubr.bf16.gmra.mxu0 %v1090
      %v1174 = vpop.f32.mrf.mxu0
      %v1175 = vadd.f32 0.0, %v1174
      %v1176 = vpop.f32.mrf.mxu0
      %v1177 = vpop.f32.mrf.mxu0
      %v1178 = vadd.f32 0.0, %v1177
      %v1179 = vpop.f32.mrf.mxu0
      %1180 = vmatprep.mubr.bf16.mxu0 0
      %1181 = vmatmul.mubr.bf16.gmra.mxu0 %v1093
      %v1182 = vpop.f32.mrf.mxu0
      %v1183 = vadd.f32 0.0, %v1182
      %v1184 = vpop.f32.mrf.mxu0
      %v1185 = vpop.f32.mrf.mxu0
      %v1186 = vadd.f32 0.0, %v1185
      %v1187 = vpop.f32.mrf.mxu0
      %1188 = vmatprep.mubr.bf16.mxu0 0
      %1189 = vmatmul.mubr.bf16.gmra.mxu0 %v1096
      %v1190 = vpop.f32.mrf.mxu0
      %v1191 = vadd.f32 0.0, %v1190
      %v1192 = vpop.f32.mrf.mxu0
      %v1193 = vpop.f32.mrf.mxu0
      %v1194 = vadd.f32 0.0, %v1193
      %v1195 = vpop.f32.mrf.mxu0
      %1196 = vmatprep.mubr.bf16.mxu0 0
      %1197 = vmatmul.mubr.bf16.gmra.mxu0 %v1099
      %v1198 = vpop.f32.mrf.mxu0
      %v1199 = vadd.f32 0.0, %v1198
      %v1200 = vpop.f32.mrf.mxu0
      %v1201 = vpop.f32.mrf.mxu0
      %v1202 = vadd.f32 0.0, %v1201
      %v1203 = vpop.f32.mrf.mxu0
      %1204 = vmatprep.mubr.bf16.mxu0 0
      %1205 = vmatmul.mubr.bf16.gmra.mxu0 %v1102
      %v1206 = vpop.f32.mrf.mxu0
      %v1207 = vadd.f32 0.0, %v1206
      %v1208 = vpop.f32.mrf.mxu0
      %v1209 = vpop.f32.mrf.mxu0
      %v1210 = vadd.f32 0.0, %v1209
      %v1211 = vpop.f32.mrf.mxu0
      %1212 = vmatprep.mubr.bf16.mxu0 0
      %1213 = vmatmul.mubr.bf16.gmra.mxu0 %v1105
      %v1214 = vpop.f32.mrf.mxu0
      %v1215 = vadd.f32 0.0, %v1214
      %v1216 = vpop.f32.mrf.mxu0
      %v1217 = vpop.f32.mrf.mxu0
      %v1218 = vadd.f32 0.0, %v1217
      %v1219 = vpop.f32.mrf.mxu0
      %1220 = vmatprep.mubr.bf16.mxu0 0
      %1221 = vmatmul.mubr.bf16.gmra.mxu0 %v1108
      %v1222 = vpop.f32.mrf.mxu0
      %v1223 = vadd.f32 0.0, %v1222
      %v1224 = vpop.f32.mrf.mxu0
      %v1225 = vpop.f32.mrf.mxu0
      %v1226 = vadd.f32 0.0, %v1225
      %v1227 = vpop.f32.mrf.mxu0
      %1228 = vmatprep.mubr.bf16.mxu0 0
      %1229 = vmatmul.mubr.bf16.gmra.mxu0 %v1111
      %v1230 = vpop.f32.mrf.mxu0
      %v1231 = vadd.f32 0.0, %v1230
      %v1232 = vpop.f32.mrf.mxu0
      %v1233 = vpop.f32.mrf.mxu0
      %v1234 = vadd.f32 0.0, %v1233
      %v1235 = vpop.f32.mrf.mxu0
      %1236 = vmatprep.mubr.bf16.mxu0 0
      %1237 = vmatmul.mubr.bf16.gmra.mxu0 %v1114
      %v1238 = vpop.f32.mrf.mxu0
      %v1239 = vadd.f32 0.0, %v1238
      %v1240 = vpop.f32.mrf.mxu0
      %v1241 = vpop.f32.mrf.mxu0
      %v1242 = vadd.f32 0.0, %v1241
      %v1243 = vpop.f32.mrf.mxu0
      %1244 = vmatprep.mubr.bf16.mxu0 0
      %1245 = vmatmul.mubr.bf16.gmra.mxu0 %v1117
      %v1246 = vpop.f32.mrf.mxu0
      %v1247 = vadd.f32 0.0, %v1246
      %v1248 = vpop.f32.mrf.mxu0
      %v1249 = vpop.f32.mrf.mxu0
      %v1250 = vadd.f32 0.0, %v1249
      %v1251 = vpop.f32.mrf.mxu0
      %1252 = vmatprep.mubr.bf16.mxu0 0
      %1253 = vmatmul.mubr.bf16.gmra.mxu0 %v1120
      %v1254 = vpop.f32.mrf.mxu0
      %v1255 = vadd.f32 0.0, %v1254
      %v1256 = vpop.f32.mrf.mxu0
      %v1257 = vpop.f32.mrf.mxu0
      %v1258 = vadd.f32 0.0, %v1257
      %v1259 = vpop.f32.mrf.mxu0
      %1260 = vmatprep.mubr.bf16.mxu0 0
      %1261 = vmatmul.mubr.bf16.gmra.mxu0 %v1123
      %v1262 = vpop.f32.mrf.mxu0
      %v1263 = vadd.f32 0.0, %v1262
      %v1264 = vpop.f32.mrf.mxu0
      %v1265 = vpop.f32.mrf.mxu0
      %v1266 = vadd.f32 0.0, %v1265
      %v1267 = vpop.f32.mrf.mxu0
      %1268 = vmatprep.mubr.bf16.mxu0 0
      %1269 = vmatmul.mubr.bf16.gmra.mxu0 %v1126
      %v1270 = vpop.f32.mrf.mxu0
      %v1271 = vadd.f32 0.0, %v1270
      %v1272 = vpop.f32.mrf.mxu0
      %v1273 = vpop.f32.mrf.mxu0
      %v1274 = vadd.f32 0.0, %v1273
      %v1275 = vpop.f32.mrf.mxu0
      %1276 = vmatprep.mubr.bf16.mxu0 0
      %1277 = vmatmul.mubr.bf16.gmra.mxu0 %v1129
      %v1278 = vpop.f32.mrf.mxu0
      %v1279 = vadd.f32 0.0, %v1278
      %v1280 = vpop.f32.mrf.mxu0
      %v1281 = vpop.f32.mrf.mxu0
      %v1282 = vadd.f32 0.0, %v1281
      %v1283 = vpop.f32.mrf.mxu0
      %1284 = vmatprep.mubr.bf16.mxu0 0
      %1285 = vmatmul.mubr.bf16.gmra.mxu0 %v1132
      %v1286 = vpop.f32.mrf.mxu0
      %v1287 = vadd.f32 0.0, %v1286
      %v1288 = vpop.f32.mrf.mxu0
      %v1289 = vpop.f32.mrf.mxu0
      %v1290 = vadd.f32 0.0, %v1289
      %v1291 = vpop.f32.mrf.mxu0
      %1292 = vmatprep.mubr.bf16.mxu0 0
      %1293 = vmatmul.mubr.bf16.gmra.mxu0 %v1135
      %v1294 = vpop.f32.mrf.mxu0
      %v1295 = vadd.f32 0.0, %v1294
      %v1296 = vpop.f32.mrf.mxu0
      %v1297 = vpop.f32.mrf.mxu0
      %v1298 = vadd.f32 0.0, %v1297
      %v1299 = vpop.f32.mrf.mxu0
      %1300 = vdwg.mxu0
      %v1301 = vadd.f32 %v834, %v1175
      %v1302 = vadd.f32 %v837, %v1178
      %v1303 = vadd.f32 %v842, %v1183
      %v1304 = vadd.f32 %v845, %v1186
      %v1305 = vadd.f32 %v850, %v1191
      %v1306 = vadd.f32 %v853, %v1194
      %v1307 = vadd.f32 %v858, %v1199
      %v1308 = vadd.f32 %v861, %v1202
      %v1309 = vadd.f32 %v866, %v1207
      %v1310 = vadd.f32 %v869, %v1210
      %v1311 = vadd.f32 %v874, %v1215
      %v1312 = vadd.f32 %v877, %v1218
      %v1313 = vadd.f32 %v882, %v1223
      %v1314 = vadd.f32 %v885, %v1226
      %v1315 = vadd.f32 %v890, %v1231
      %v1316 = vadd.f32 %v893, %v1234
      %v1317 = vadd.f32 %v898, %v1239
      %v1318 = vadd.f32 %v901, %v1242
      %v1319 = vadd.f32 %v906, %v1247
      %v1320 = vadd.f32 %v909, %v1250
      %v1321 = vadd.f32 %v914, %v1255
      %v1322 = vadd.f32 %v917, %v1258
      %v1323 = vadd.f32 %v922, %v1263
      %v1324 = vadd.f32 %v925, %v1266
      %v1325 = vadd.f32 %v930, %v1271
      %v1326 = vadd.f32 %v933, %v1274
      %v1327 = vadd.f32 %v938, %v1279
      %v1328 = vadd.f32 %v941, %v1282
      %v1329 = vadd.f32 %v946, %v1287
      %v1330 = vadd.f32 %v949, %v1290
      %v1331 = vadd.f32 %v954, %v1295
      %v1332 = vadd.f32 %v957, %v1298
      %v1333 = vld [vmem:[%s256] sm:$0x1]
      %v1335 = vlaneseq
      %v1336 = vshrl.u32 %v1335, 7
      %v1337 = vsub.s32 0, %v1336
      %v1338 = vrot.slane %v1333, %v1337
      %v1340 = vadd.f32 %v1301, %v1338
      %v1341 = vadd.f32 %v1302, %v1338
      %v1342 = vadd.f32 %v1303, %v1338
      %v1343 = vadd.f32 %v1304, %v1338
      %v1344 = vadd.f32 %v1305, %v1338
      %v1345 = vadd.f32 %v1306, %v1338
      %v1346 = vadd.f32 %v1307, %v1338
      %v1347 = vadd.f32 %v1308, %v1338
      %v1348 = vadd.f32 %v1309, %v1338
      %v1349 = vadd.f32 %v1310, %v1338
      %v1350 = vadd.f32 %v1311, %v1338
      %v1351 = vadd.f32 %v1312, %v1338
      %v1352 = vadd.f32 %v1313, %v1338
      %v1353 = vadd.f32 %v1314, %v1338
      %v1354 = vadd.f32 %v1315, %v1338
      %v1355 = vadd.f32 %v1316, %v1338
      %v1356 = vadd.f32 %v1317, %v1338
      %v1357 = vadd.f32 %v1318, %v1338
      %v1358 = vadd.f32 %v1319, %v1338
      %v1359 = vadd.f32 %v1320, %v1338
      %v1360 = vadd.f32 %v1321, %v1338
      %v1361 = vadd.f32 %v1322, %v1338
      %v1362 = vadd.f32 %v1323, %v1338
      %v1363 = vadd.f32 %v1324, %v1338
      %v1364 = vadd.f32 %v1325, %v1338
      %v1365 = vadd.f32 %v1326, %v1338
      %v1366 = vadd.f32 %v1327, %v1338
      %v1367 = vadd.f32 %v1328, %v1338
      %v1368 = vadd.f32 %v1329, %v1338
      %v1369 = vadd.f32 %v1330, %v1338
      %v1370 = vadd.f32 %v1331, %v1338
      %v1371 = vadd.f32 %v1332, %v1338
      %v1372 = vpack.c.bf16 %v1341, %v1340
      %v1373 = vpack.c.bf16 %v1343, %v1342
      %v1374 = vpack.c.bf16 %v1345, %v1344
      %v1375 = vpack.c.bf16 %v1347, %v1346
      %v1376 = vpack.c.bf16 %v1349, %v1348
      %v1377 = vpack.c.bf16 %v1351, %v1350
      %v1378 = vpack.c.bf16 %v1353, %v1352
      %v1379 = vpack.c.bf16 %v1355, %v1354
      %v1380 = vpack.c.bf16 %v1357, %v1356
      %v1381 = vpack.c.bf16 %v1359, %v1358
      %v1382 = vpack.c.bf16 %v1361, %v1360
      %v1383 = vpack.c.bf16 %v1363, %v1362
      %v1384 = vpack.c.bf16 %v1365, %v1364
      %v1385 = vpack.c.bf16 %v1367, %v1366
      %v1386 = vpack.c.bf16 %v1369, %v1368
      %v1387 = vpack.c.bf16 %v1371, %v1370
      %v1404 = vunpack.c.l.b16 %v1372
      %v1405 = vunpack.c.h.b16 %v1372
      %v1406 = vunpack.c.l.b16 %v1373
      %v1407 = vunpack.c.h.b16 %v1373
      %v1408 = vunpack.c.l.b16 %v1374
      %v1409 = vunpack.c.h.b16 %v1374
      %v1410 = vunpack.c.l.b16 %v1375
      %v1411 = vunpack.c.h.b16 %v1375
      %v1412 = vunpack.c.l.b16 %v1376
      %v1413 = vunpack.c.h.b16 %v1376
      %v1414 = vunpack.c.l.b16 %v1377
      %v1415 = vunpack.c.h.b16 %v1377
      %v1416 = vunpack.c.l.b16 %v1378
      %v1417 = vunpack.c.h.b16 %v1378
      %v1418 = vunpack.c.l.b16 %v1379
      %v1419 = vunpack.c.h.b16 %v1379
      %v1420 = vunpack.c.l.b16 %v1380
      %v1421 = vunpack.c.h.b16 %v1380
      %v1422 = vunpack.c.l.b16 %v1381
      %v1423 = vunpack.c.h.b16 %v1381
      %v1424 = vunpack.c.l.b16 %v1382
      %v1425 = vunpack.c.h.b16 %v1382
      %v1426 = vunpack.c.l.b16 %v1383
      %v1427 = vunpack.c.h.b16 %v1383
      %v1428 = vunpack.c.l.b16 %v1384
      %v1429 = vunpack.c.h.b16 %v1384
      %v1430 = vunpack.c.l.b16 %v1385
      %v1431 = vunpack.c.h.b16 %v1385
      %v1432 = vunpack.c.l.b16 %v1386
      %v1433 = vunpack.c.h.b16 %v1386
      %v1434 = vunpack.c.l.b16 %v1387
      %v1435 = vunpack.c.h.b16 %v1387
      %v1436 = vpack.c.b16 %v1404, %v1404
      %v1437 = vpack.c.b16 %v1405, %v1405
      %v1438 = vpack.c.b16 %v1406, %v1406
      %v1439 = vpack.c.b16 %v1407, %v1407
      %v1440 = vpack.c.b16 %v1408, %v1408
      %v1441 = vpack.c.b16 %v1409, %v1409
      %v1442 = vpack.c.b16 %v1410, %v1410
      %v1443 = vpack.c.b16 %v1411, %v1411
      %v1444 = vpack.c.b16 %v1412, %v1412
      %v1445 = vpack.c.b16 %v1413, %v1413
      %v1446 = vpack.c.b16 %v1414, %v1414
      %v1447 = vpack.c.b16 %v1415, %v1415
      %v1448 = vpack.c.b16 %v1416, %v1416
      %v1449 = vpack.c.b16 %v1417, %v1417
      %v1450 = vpack.c.b16 %v1418, %v1418
      %v1451 = vpack.c.b16 %v1419, %v1419
      %v1452 = vpack.c.b16 %v1420, %v1420
      %v1453 = vpack.c.b16 %v1421, %v1421
      %v1454 = vpack.c.b16 %v1422, %v1422
      %v1455 = vpack.c.b16 %v1423, %v1423
      %v1456 = vpack.c.b16 %v1424, %v1424
      %v1457 = vpack.c.b16 %v1425, %v1425
      %v1458 = vpack.c.b16 %v1426, %v1426
      %v1459 = vpack.c.b16 %v1427, %v1427
      %v1460 = vpack.c.b16 %v1428, %v1428
      %v1461 = vpack.c.b16 %v1429, %v1429
      %v1462 = vpack.c.b16 %v1430, %v1430
      %v1463 = vpack.c.b16 %v1431, %v1431
      %v1464 = vpack.c.b16 %v1432, %v1432
      %v1465 = vpack.c.b16 %v1433, %v1433
      %v1466 = vpack.c.b16 %v1434, %v1434
      %v1467 = vpack.c.b16 %v1435, %v1435
      %1500 = vst [vmem:[%s273] sm:$0xf] %v1436
      %1501 = vst [vmem:[%s273 + $0x4] sm:$0xf] %v1437
      %1502 = vst [vmem:[%s273 + $0x8] sm:$0xf] %v1438
      %1503 = vst [vmem:[%s273 + $0xc] sm:$0xf] %v1439
      %1504 = vst [vmem:[%s273 + $0x10] sm:$0xf] %v1440
      %1505 = vst [vmem:[%s273 + $0x14] sm:$0xf] %v1441
      %1506 = vst [vmem:[%s273 + $0x18] sm:$0xf] %v1442
      %1507 = vst [vmem:[%s273 + $0x1c] sm:$0xf] %v1443
      %1508 = vst [vmem:[%s273 + $0x20] sm:$0xf] %v1444
      %1509 = vst [vmem:[%s273 + $0x24] sm:$0xf] %v1445
      %1510 = vst [vmem:[%s273 + $0x28] sm:$0xf] %v1446
      %1511 = vst [vmem:[%s273 + $0x2c] sm:$0xf] %v1447
      %1512 = vst [vmem:[%s273 + $0x30] sm:$0xf] %v1448
      %1513 = vst [vmem:[%s273 + $0x34] sm:$0xf] %v1449
      %1514 = vst [vmem:[%s273 + $0x38] sm:$0xf] %v1450
      %1515 = vst [vmem:[%s273 + $0x3c] sm:$0xf] %v1451
      %1516 = vst [vmem:[%s273 + $0x40] sm:$0xf] %v1452
      %1517 = vst [vmem:[%s273 + $0x44] sm:$0xf] %v1453
      %1518 = vst [vmem:[%s273 + $0x48] sm:$0xf] %v1454
      %1519 = vst [vmem:[%s273 + $0x4c] sm:$0xf] %v1455
      %1520 = vst [vmem:[%s273 + $0x50] sm:$0xf] %v1456
      %1521 = vst [vmem:[%s273 + $0x54] sm:$0xf] %v1457
      %1522 = vst [vmem:[%s273 + $0x58] sm:$0xf] %v1458
      %1523 = vst [vmem:[%s273 + $0x5c] sm:$0xf] %v1459
      %1524 = vst [vmem:[%s273 + $0x60] sm:$0xf] %v1460
      %1525 = vst [vmem:[%s273 + $0x64] sm:$0xf] %v1461
      %1526 = vst [vmem:[%s273 + $0x68] sm:$0xf] %v1462
      %1527 = vst [vmem:[%s273 + $0x6c] sm:$0xf] %v1463
      %1528 = vst [vmem:[%s273 + $0x70] sm:$0xf] %v1464
      %1529 = vst [vmem:[%s273 + $0x74] sm:$0xf] %v1465
      %1530 = vst [vmem:[%s273 + $0x78] sm:$0xf] %v1466
      %1531 = vst [vmem:[%s273 + $0x7c] sm:$0xf] %v1467
      %s1532 = smul.u32 16, %s23
      %s1533 = smul.u32 2, %s21
      %p1534 = scmp.lt.s32.totalorder %s20, 1
      %s1535 = scalar_select %p1534, %s20, 1
      %p1536 = scmp.lt.s32.totalorder %s1532, 15
      %s1537 = scalar_select %p1536, %s1532, 15
      %p1538 = scmp.lt.s32.totalorder %s1533, 1
      %s1539 = scalar_select %p1538, %s1533, 1
      %p1540 = scmp.lt.s32.totalorder %s22, 0
      %s1541 = scalar_select %p1540, %s22, 0
      %s1542 = sadd.s32 %s1541, %s1539
      %s1543 = smul.addr %s1537, 2
      %s1544 = sadd.s32 %s1542, %s1543
      %s1545 = smul.addr %s1535, 32
      %s1546 = sadd.s32 %s1544, %s1545
      %s1547 = smul.addr %s1546, 4
      %s1548 = scalar_lea.vmem %s3, %s1547
      // Predicated region
      $region33: #{equal_conv2d.1} parent=31 // pred_check
        %p1549 = pneg %p144
      $region34: #{equal_conv2d.1} parent=31 // pred_check_branch
        %1551 = sbr.rel (%p1549) target = $region36
      $region35: #{equal_conv2d.1} parent=31 // pred_region
        %s1552 = smul.u32 16, %s23
        %s1553 = smul.u32 2, %s21
      $region36: #{equal_conv2d.1} parent=31 // pred_fallthru
        _
    $region32: #{equal_conv2d.1} parent=5 // pred_fallthru
      _
    %p1554 = scmp.le.s32.totalorder 2, %s9
    // Predicated region
    $region37: #{equal_conv2d.1} parent=5 // pred_check
      %p1555 = pneg %p1554
    $region38: #{equal_conv2d.1} parent=5 // pred_check_branch
      %1557 = sbr.rel (%p1555) target = $region40
    $region39: #{equal_conv2d.1} parent=5 // pred_region
      %s1558 = ssub.s32 %s9, 2
      // Predicated region
      $region41: #{equal_conv2d.1} parent=39 // pred_check
        %p1559 = pneg %p150
      $region42: #{equal_conv2d.1} parent=39 // pred_check_branch
        %1561 = sbr.rel (%p1559) target = $region44
      $region43: #{equal_conv2d.1} parent=39 // pred_region
        %s1562 = smul.u32 16, %s27
        %s1563 = smul.u32 2, %s25
        %p1564 = scmp.lt.s32.totalorder %s24, 1
        %s1565 = scalar_select %p1564, %s24, 1
        %p1566 = scmp.lt.s32.totalorder %s1562, 15
        %s1567 = scalar_select %p1566, %s1562, 15
        %p1568 = scmp.lt.s32.totalorder %s1563, 1
        %s1569 = scalar_select %p1568, %s1563, 1
        %p1570 = scmp.lt.s32.totalorder %s26, 0
        %s1571 = scalar_select %p1570, %s26, 0
        %s1572 = sadd.s32 %s1571, %s1569
        %s1573 = smul.addr %s1567, 2
        %s1574 = sadd.s32 %s1572, %s1573
        %s1575 = smul.addr %s1565, 32
        %s1576 = sadd.s32 %s1574, %s1575
        %s1577 = smul.addr %s1576, 4
        %s1578 = scalar_lea.vmem %s3, %s1577
      $region44: #{equal_conv2d.1} parent=39 // pred_fallthru
        _
    $region40: #{equal_conv2d.1} parent=5 // pred_fallthru
      _
  $region6: #{equal_conv2d.1} parent=0 // loop_footer
    %s13 = sadd.s32 1, %s9
  $region7: #{equal_conv2d.1} parent=0 // loop_footer_branch
    %8 = sbr.rel target = $region3
  $region8: #{equal_conv2d.1} parent=0 // loop_exit
    _

</llo_original>
